<compile_context>
chip_gen: v7x
topology: tpu7x:2x2x1
jax: 0.10.0
libtpu: 0.0.40
codegen_flags: <defaults>
</compile_context>

<pallas_src>
import jax
import jax.numpy as jnp
from jax.experimental import pallas as pl
from jax.experimental.pallas import tpu as pltpu


# ----------------------------------------------------------------------------
# Fused ODENet forward kernel
# ----------------------------------------------------------------------------
def _odenet_forward_kernel(y_ref, ws_ref, bs_ref, wp_ref, bp_ref,
                           wcs_ref, wcp_ref, gm_ref, o_ref):
    y = y_ref[...]
    shifted = y - 0.5
    s = shifted / (1.0 + jnp.abs(shifted))          # SoftsignMod(y)
    ls = jnp.log1p(s)                               # LogShiftedSoftSignMod(y)

    sums = jnp.dot(s, ws_ref[...],
                   preferred_element_type=jnp.float32) + bs_ref[...]
    prods = jnp.exp(jnp.dot(ls, wp_ref[...],
                            preferred_element_type=jnp.float32) + bp_ref[...])

    # concat([sums, prods], -1) @ W_comb.T == sums @ Wc_s.T + prods @ Wc_p.T
    joint = (jnp.dot(sums, wcs_ref[...], preferred_element_type=jnp.float32)
             + jnp.dot(prods, wcp_ref[...], preferred_element_type=jnp.float32))

    o_ref[...] = (jnp.maximum(gm_ref[...], 0.0) * (joint - y)).astype(o_ref.dtype)


def _pick_batch_tile(batch, max_tile):
    """Largest 8-aligned tile <= max_tile that divides batch; no shrink loop."""
    for cand in (512, 256, 128, 64, 32, 16, 8):
        if cand <= max_tile and batch % cand == 0:
            return cand, 0
    if batch <= max_tile:
        return batch, 0                 # single full-extent block (always legal)
    tile = max(8, (min(max_tile, 256) // 8) * 8)
    return tile, (-batch) % tile        # rare ragged fallback: pad batch rows


def pack_odenet_params(params):
    """One-time weight re-layout so repeated forward calls skip it.

    Transposes the linear weights to (in, out) layout for row-major
    (B, D) @ (D, N) matmuls and splits W_comb so the concat disappears.
    """
    w_sums, b_sums = params["w_sums"], params["b_sums"]
    w_prods, b_prods = params["w_prods"], params["b_prods"]
    w_comb, gene_mult = params["w_comb"], params["gene_mult"]
    Np = w_sums.shape[0]
    D = w_sums.shape[1]
    return dict(
        ws_t=jnp.asarray(w_sums, jnp.float32).T,            # (D, Np)
        wp_t=jnp.asarray(w_prods, jnp.float32).T,           # (D, Np)
        wcs_t=jnp.asarray(w_comb[:, :Np], jnp.float32).T,   # (Np, D)
        wcp_t=jnp.asarray(w_comb[:, Np:], jnp.float32).T,   # (Np, D)
        bs=jnp.asarray(b_sums, jnp.float32).reshape(1, Np),
        bp=jnp.asarray(b_prods, jnp.float32).reshape(1, Np),
        gm=jnp.asarray(gene_mult, jnp.float32).reshape(1, D),
    )


def odenet_forward(t, y, params, *, batch_tile=256):
    """Fused ODENet.forward(t, y). `t` is unused, matching the PyTorch module.

    `params` may be either the raw dict (w_sums/b_sums/...) or an
    already-packed dict from `pack_odenet_params`.
    """
    del t
    orig_dtype = y.dtype
    y = y.astype(jnp.float32)
    B, D = y.shape

    packed = params if "ws_t" in params else pack_odenet_params(params)
    ws_t, wp_t = packed["ws_t"], packed["wp_t"]
    wcs_t, wcp_t = packed["wcs_t"], packed["wcp_t"]
    bs, bp, gm = packed["bs"], packed["bp"], packed["gm"]
    Np = ws_t.shape[1]

    tb, pad_b = _pick_batch_tile(B, batch_tile)
    if pad_b:
        y = jnp.pad(y, ((0, pad_b), (0, 0)))
    Bp = B + pad_b
    grid = (Bp // tb,)

    flops = 8 * B * D * Np + 10 * B * D
    transcendentals = B * (2 * D + Np)
    bytes_accessed = 4 * (2 * B * D + 4 * D * Np + 2 * Np + 2 * D)

    out = pl.pallas_call(
        _odenet_forward_kernel,
        out_shape=jax.ShapeDtypeStruct((Bp, D), jnp.float32),
        grid_spec=pltpu.PrefetchScalarGridSpec(
            num_scalar_prefetch=0,
            grid=grid,
            in_specs=[
                pl.BlockSpec((tb, D), lambda i: (i, 0)),    # y tile
                pl.BlockSpec((D, Np), lambda i: (0, 0)),    # W_sums^T (resident)
                pl.BlockSpec((1, Np), lambda i: (0, 0)),    # b_sums
                pl.BlockSpec((D, Np), lambda i: (0, 0)),    # W_prods^T
                pl.BlockSpec((1, Np), lambda i: (0, 0)),    # b_prods
                pl.BlockSpec((Np, D), lambda i: (0, 0)),    # W_comb[:, :Np]^T
                pl.BlockSpec((Np, D), lambda i: (0, 0)),    # W_comb[:, Np:]^T
                pl.BlockSpec((1, D), lambda i: (0, 0)),     # gene_multipliers
            ],
            out_specs=pl.BlockSpec((tb, D), lambda i: (i, 0)),
        ),
        compiler_params=pltpu.CompilerParams(
            dimension_semantics=("parallel",)),
        cost_estimate=pl.CostEstimate(
            flops=int(flops),
            transcendentals=int(transcendentals),
            bytes_accessed=int(bytes_accessed)),
    )(y, ws_t, bs, wp_t, bp, wcs_t, wcp_t, gm)

    if pad_b:
        out = out[:B]
    return out.astype(orig_dtype)


# ----------------------------------------------------------------------------
# Standalone LogShiftedSoftSignMod (optional utility kernel)
# ----------------------------------------------------------------------------
def _log_shifted_softsign_kernel(x_ref, o_ref):
    x = x_ref[...]
    shifted = x - 0.5
    o_ref[...] = jnp.log1p(shifted / (1.0 + jnp.abs(shifted)))


def log_shifted_softsign_mod(x: jax.Array, *, target_block_elems=2048 * 128):
    """Elementwise log1p(softsign(x - 0.5)); lane-dense ~1 MiB f32 blocks."""
    orig_shape, orig_dtype = x.shape, x.dtype
    n = x.size
    x_flat = jnp.ravel(x).astype(jnp.float32)

    # Fold as much as possible into the lane dimension (fewer, larger DMAs);
    # prefer widths that make the 2-D slab copy-free.
    lanes = 128
    for cand in (1024, 512, 256):
        if n % (8 * cand) == 0:
            lanes = cand
            break

    rows = -(-n // lanes)
    target_rows = max(8, (target_block_elems // lanes) // 8 * 8)   # ~1 MiB f32
    num_tiles = -(-rows // target_rows)
    tile_rows = -(-(-(-rows // num_tiles)) // 8) * 8               # ceil, 8-aligned
    rows_p = num_tiles * tile_rows

    n_pad = rows_p * lanes - n
    if n_pad:
        # Only for ragged sizes; aligned inputs reshape copy-free (no pad/slice).
        x_flat = jnp.pad(x_flat, (0, n_pad))
    x2d = x_flat.reshape(rows_p, lanes)

    out2d = pl.pallas_call(
        _log_shifted_softsign_kernel,
        out_shape=jax.ShapeDtypeStruct((rows_p, lanes), jnp.float32),
        grid_spec=pltpu.PrefetchScalarGridSpec(
            num_scalar_prefetch=0,
            grid=(num_tiles,),
            in_specs=[pl.BlockSpec((tile_rows, lanes), lambda i: (i, 0))],
            out_specs=pl.BlockSpec((tile_rows, lanes), lambda i: (i, 0)),
        ),
        compiler_params=pltpu.CompilerParams(
            dimension_semantics=("parallel",)),
        cost_estimate=pl.CostEstimate(
            flops=int(4 * n), transcendentals=int(2 * n),
            bytes_accessed=int(8 * n)),
    )(x2d)

    out_flat = out2d.reshape(-1)
    if n_pad:
        out_flat = out_flat[:n]
    return out_flat.reshape(orig_shape).astype(orig_dtype)


# ----------------------------------------------------------------------------
# Pure-JAX reference + parameter construction
# ----------------------------------------------------------------------------
def init_odenet_params(key, ndim, neurons):
    # TODO(synk): torch.nn.init.sparse_ (95% zeros) is a training-time detail;
    # dense random params of similar scale are used for kernel validation.
    k1, k2, k3, k4, k5, k6 = jax.random.split(key, 6)
    std = 0.05
    return dict(
        w_sums=std * jax.random.normal(k1, (neurons, ndim), jnp.float32),
        b_sums=std * jax.random.normal(k2, (neurons,), jnp.float32),
        w_prods=std * jax.random.normal(k3, (neurons, ndim), jnp.float32),
        b_prods=std * jax.random.normal(k4, (neurons,), jnp.float32),
        w_comb=std * jax.random.normal(k5, (ndim, 2 * neurons), jnp.float32),
        gene_mult=jax.random.uniform(k6, (1, ndim), jnp.float32),
    )


def _odenet_reference(t, y, params):
    del t
    shifted = y - 0.5
    s = shifted / (1.0 + jnp.abs(shifted))
    sums = jnp.dot(s, params["w_sums"].T, precision="highest") + params["b_sums"]
    prods = jnp.exp(jnp.dot(jnp.log1p(s), params["w_prods"].T,
                            precision="highest") + params["b_prods"])
    joint = jnp.dot(jnp.concatenate([sums, prods], axis=-1),
                    params["w_comb"].T, precision="highest")
    return jnp.maximum(params["gene_mult"], 0.0) * (joint - y)


if __name__ == "__main__":
    key = jax.random.PRNGKey(0)
    k_y, k_p, k_x = jax.random.split(key, 3)

    # Small shapes consistent with ODENet.forward(t, y): y is (batch, ndim).
    batch, ndim, neurons = 16, 128, 64
    params = init_odenet_params(k_p, ndim, neurons)
    y = jax.random.normal(k_y, (batch, ndim), dtype=jnp.float32)
    t = jnp.float32(0.0)

    # Pack weights once (what an ODE solver would do before integrating).
    packed = pack_odenet_params(params)

    out = jax.block_until_ready(odenet_forward(t, y, packed))
    ref = _odenet_reference(t, y, params)
    assert out.shape == y.shape and out.dtype == y.dtype
    # MXU/XLA matmul reduction order & pass count differ slightly from the
    # pure-JAX reference, hence the modest tolerance.
    assert jnp.allclose(out, ref, atol=1e-3, rtol=1e-2), "fused ODENet mismatch"

    # Raw (unpacked) params path and the multi-block (grid > 1) batch tiling.
    out_tiled = jax.block_until_ready(odenet_forward(t, y, params, batch_tile=8))
    assert jnp.allclose(out_tiled, ref, atol=1e-3, rtol=1e-2), "tiled mismatch"

    # Standalone LogShiftedSoftSignMod activation kernel.
    x = jax.random.normal(k_x, (2, 4, 16, 16), dtype=jnp.float32)
    ya = jax.block_until_ready(log_shifted_softsign_mod(x))
    sa = x - 0.5
    ya_ref = jnp.log1p(sa / (1.0 + jnp.abs(sa)))
    assert ya.shape == x.shape and ya.dtype == x.dtype
    assert jnp.allclose(ya, ya_ref, atol=1e-6, rtol=1e-6), "activation mismatch"

    print("KERNEL_OK")
</pallas_src>

<mosaic_0001>
module attributes {stable_mosaic.version = 11 : i64} {
  func.func @_odenet_forward_kernel(%arg0: i32, %arg1: memref<16x128xf32, #tpu.memory_space<vmem>>, %arg2: memref<128x64xf32, #tpu.memory_space<vmem>>, %arg3: memref<1x64xf32, #tpu.memory_space<vmem>>, %arg4: memref<128x64xf32, #tpu.memory_space<vmem>>, %arg5: memref<1x64xf32, #tpu.memory_space<vmem>>, %arg6: memref<64x128xf32, #tpu.memory_space<vmem>>, %arg7: memref<64x128xf32, #tpu.memory_space<vmem>>, %arg8: memref<1x128xf32, #tpu.memory_space<vmem>>, %arg9: memref<16x128xf32, #tpu.memory_space<vmem>>) attributes {dimension_semantics = [#tpu.dimension_semantics<parallel>], iteration_bounds = array<i64: 1>, scalar_prefetch = 0 : i64, scratch_operands = 0 : i64, tpu.core_type = #tpu.core_type<tc>, window_params = [{transform_indices = @transform_0, window_bounds = array<i64: 16, 128>}, {pipeline_mode = #tpu.pipeline_mode<synchronous>, transform_indices = @transform_1, window_bounds = array<i64: 128, 64>}, {pipeline_mode = #tpu.pipeline_mode<synchronous>, transform_indices = @transform_2, window_bounds = array<i64: 1, 64>}, {pipeline_mode = #tpu.pipeline_mode<synchronous>, transform_indices = @transform_3, window_bounds = array<i64: 128, 64>}, {pipeline_mode = #tpu.pipeline_mode<synchronous>, transform_indices = @transform_4, window_bounds = array<i64: 1, 64>}, {pipeline_mode = #tpu.pipeline_mode<synchronous>, transform_indices = @transform_5, window_bounds = array<i64: 64, 128>}, {pipeline_mode = #tpu.pipeline_mode<synchronous>, transform_indices = @transform_6, window_bounds = array<i64: 64, 128>}, {pipeline_mode = #tpu.pipeline_mode<synchronous>, transform_indices = @transform_7, window_bounds = array<i64: 1, 128>}, {transform_indices = @transform_8, window_bounds = array<i64: 16, 128>}]} {
    %c0 = arith.constant 0 : index
    %c0_0 = arith.constant 0 : index
    %0 = vector.load %arg1[%c0, %c0_0] : memref<16x128xf32, #tpu.memory_space<vmem>>, vector<16x128xf32>
    %cst = arith.constant 5.000000e-01 : f32
    %1 = vector.broadcast %cst : f32 to vector<16x128xf32>
    %2 = arith.subf %0, %1 : vector<16x128xf32>
    %3 = math.absf %2 : vector<16x128xf32>
    %cst_1 = arith.constant 1.000000e+00 : f32
    %4 = vector.broadcast %cst_1 : f32 to vector<16x128xf32>
    %5 = arith.addf %4, %3 : vector<16x128xf32>
    %6 = arith.divf %2, %5 : vector<16x128xf32>
    %7 = math.log1p %6 : vector<16x128xf32>
    %c0_2 = arith.constant 0 : index
    %c0_3 = arith.constant 0 : index
    %8 = vector.load %arg2[%c0_2, %c0_3] : memref<128x64xf32, #tpu.memory_space<vmem>>, vector<128x64xf32>
    %cst_4 = arith.constant dense<0.000000e+00> : vector<16x64xf32>
    %9 = tpu.matmul %6, %8, %cst_4 {dimension_numbers = #tpu.dot_dimension_numbers<[1], [0], [0], [1], [0, 0, 1, 1], [], []>} : vector<16x128xf32>, vector<128x64xf32>, vector<16x64xf32> -> vector<16x64xf32>
    %c0_5 = arith.constant 0 : index
    %c0_6 = arith.constant 0 : index
    %10 = vector.load %arg3[%c0_5, %c0_6] : memref<1x64xf32, #tpu.memory_space<vmem>>, vector<1x64xf32>
    %11 = vector.broadcast %10 : vector<1x64xf32> to vector<16x64xf32>
    %12 = arith.addf %9, %11 : vector<16x64xf32>
    %c0_7 = arith.constant 0 : index
    %c0_8 = arith.constant 0 : index
    %13 = vector.load %arg4[%c0_7, %c0_8] : memref<128x64xf32, #tpu.memory_space<vmem>>, vector<128x64xf32>
    %cst_9 = arith.constant dense<0.000000e+00> : vector<16x64xf32>
    %14 = tpu.matmul %7, %13, %cst_9 {dimension_numbers = #tpu.dot_dimension_numbers<[1], [0], [0], [1], [0, 0, 1, 1], [], []>} : vector<16x128xf32>, vector<128x64xf32>, vector<16x64xf32> -> vector<16x64xf32>
    %c0_10 = arith.constant 0 : index
    %c0_11 = arith.constant 0 : index
    %15 = vector.load %arg5[%c0_10, %c0_11] : memref<1x64xf32, #tpu.memory_space<vmem>>, vector<1x64xf32>
    %16 = vector.broadcast %15 : vector<1x64xf32> to vector<16x64xf32>
    %17 = arith.addf %14, %16 : vector<16x64xf32>
    %18 = math.exp %17 : vector<16x64xf32>
    %c0_12 = arith.constant 0 : index
    %c0_13 = arith.constant 0 : index
    %19 = vector.load %arg6[%c0_12, %c0_13] : memref<64x128xf32, #tpu.memory_space<vmem>>, vector<64x128xf32>
    %cst_14 = arith.constant dense<0.000000e+00> : vector<16x128xf32>
    %20 = tpu.matmul %12, %19, %cst_14 {dimension_numbers = #tpu.dot_dimension_numbers<[1], [0], [0], [1], [0, 0, 1, 1], [], []>} : vector<16x64xf32>, vector<64x128xf32>, vector<16x128xf32> -> vector<16x128xf32>
    %c0_15 = arith.constant 0 : index
    %c0_16 = arith.constant 0 : index
    %21 = vector.load %arg7[%c0_15, %c0_16] : memref<64x128xf32, #tpu.memory_space<vmem>>, vector<64x128xf32>
    %cst_17 = arith.constant dense<0.000000e+00> : vector<16x128xf32>
    %22 = tpu.matmul %18, %21, %cst_17 {dimension_numbers = #tpu.dot_dimension_numbers<[1], [0], [0], [1], [0, 0, 1, 1], [], []>} : vector<16x64xf32>, vector<64x128xf32>, vector<16x128xf32> -> vector<16x128xf32>
    %23 = arith.addf %20, %22 : vector<16x128xf32>
    %c0_18 = arith.constant 0 : index
    %c0_19 = arith.constant 0 : index
    %24 = vector.load %arg8[%c0_18, %c0_19] : memref<1x128xf32, #tpu.memory_space<vmem>>, vector<1x128xf32>
    %cst_20 = arith.constant 0.000000e+00 : f32
    %25 = vector.broadcast %cst_20 : f32 to vector<1x128xf32>
    %26 = arith.maximumf %24, %25 : vector<1x128xf32>
    %27 = arith.subf %23, %0 : vector<16x128xf32>
    %28 = vector.broadcast %26 : vector<1x128xf32> to vector<16x128xf32>
    %29 = arith.mulf %28, %27 : vector<16x128xf32>
    %c0_21 = arith.constant 0 : index
    %c0_22 = arith.constant 0 : index
    %30 = vector.load %arg9[%c0_21, %c0_22] : memref<16x128xf32, #tpu.memory_space<vmem>>, vector<16x128xf32>
    tpu.vector_store %arg9[%c0_21, %c0_22], %29 {strides = array<i32>} : memref<16x128xf32, #tpu.memory_space<vmem>>, vector<16x128xf32>,
    return
  }
  func.func @transform_0(%arg0: i32) -> (i32, i32) {
    %c0_i32 = arith.constant 0 : i32
    %c0_i32_0 = arith.constant 0 : i32
    return %arg0, %c0_i32 : i32, i32
  }
  func.func @transform_1(%arg0: i32) -> (i32, i32) {
    %c0_i32 = arith.constant 0 : i32
    %c0_i32_0 = arith.constant 0 : i32
    %c0_i32_1 = arith.constant 0 : i32
    return %c0_i32, %c0_i32_0 : i32, i32
  }
  func.func @transform_2(%arg0: i32) -> (i32, i32) {
    %c0_i32 = arith.constant 0 : i32
    %c0_i32_0 = arith.constant 0 : i32
    %c0_i32_1 = arith.constant 0 : i32
    return %c0_i32, %c0_i32_0 : i32, i32
  }
  func.func @transform_3(%arg0: i32) -> (i32, i32) {
    %c0_i32 = arith.constant 0 : i32
    %c0_i32_0 = arith.constant 0 : i32
    %c0_i32_1 = arith.constant 0 : i32
    return %c0_i32, %c0_i32_0 : i32, i32
  }
  func.func @transform_4(%arg0: i32) -> (i32, i32) {
    %c0_i32 = arith.constant 0 : i32
    %c0_i32_0 = arith.constant 0 : i32
    %c0_i32_1 = arith.constant 0 : i32
    return %c0_i32, %c0_i32_0 : i32, i32
  }
  func.func @transform_5(%arg0: i32) -> (i32, i32) {
    %c0_i32 = arith.constant 0 : i32
    %c0_i32_0 = arith.constant 0 : i32
    %c0_i32_1 = arith.constant 0 : i32
    return %c0_i32, %c0_i32_0 : i32, i32
  }
  func.func @transform_6(%arg0: i32) -> (i32, i32) {
    %c0_i32 = arith.constant 0 : i32
    %c0_i32_0 = arith.constant 0 : i32
    %c0_i32_1 = arith.constant 0 : i32
    return %c0_i32, %c0_i32_0 : i32, i32
  }
  func.func @transform_7(%arg0: i32) -> (i32, i32) {
    %c0_i32 = arith.constant 0 : i32
    %c0_i32_0 = arith.constant 0 : i32
    %c0_i32_1 = arith.constant 0 : i32
    return %c0_i32, %c0_i32_0 : i32, i32
  }
  func.func @transform_8(%arg0: i32) -> (i32, i32) {
    %c0_i32 = arith.constant 0 : i32
    %c0_i32_0 = arith.constant 0 : i32
    return %arg0, %c0_i32 : i32, i32
  }
}

</mosaic_0001>

<llo_original>
// kernel: tpu_custom_call.1
$region0: #{tpu_custom_call.1}
  #allocation0 [shape = 'u32[]', space=smem, size = 0x4, offset = 0x4, fixed_abs, tag = 'smem constant byte address 0x4 - core index']
  #allocation1 [shape = 'u32[144,128]{1,0:T(1,128)}', space=vmem, size = 0x12000, scoped, tag = 'internal scratch']
  %s0 = inlined_call_operand.vmem [shape: f32[16,128], index: 0, kind: input, shape index: {}]
  %s1 = inlined_call_operand.vmem [shape: f32[128,64], index: 1, kind: input, shape index: {}]
  %s2 = inlined_call_operand.vmem [shape: f32[1,64], index: 2, kind: input, shape index: {}]
  %s3 = inlined_call_operand.vmem [shape: f32[128,64], index: 3, kind: input, shape index: {}]
  %s4 = inlined_call_operand.vmem [shape: f32[1,64], index: 4, kind: input, shape index: {}]
  %s5 = inlined_call_operand.vmem [shape: f32[64,128], index: 5, kind: input, shape index: {}]
  %s6 = inlined_call_operand.vmem [shape: f32[64,128], index: 6, kind: input, shape index: {}]
  %s7 = inlined_call_operand.vmem [shape: f32[1,128], index: 7, kind: input, shape index: {}]
  %s8 = inlined_call_operand.hbm [shape: f32[16,128], index: 8, kind: output, shape index: {}]
  %s9 = sld [smem:[#allocation0]]
  $region42: #{tpu_custom_call.1} parent=0
    _
  %s11 = ssub.s32 1, %s9
  %s12 = scalar_select 0, %s11, %s9
  $region1: #{tpu_custom_call.1} parent=0
    #allocation2 [shape = 'u8[8192]{0}', space=vmem, size = 0x2000, scoped, tag = 'output window, operand 0, single buffered']
    #allocation3 [shape = 's32[1]{0}', space=sflag, size = 0x4, scoped, tag = 'scoped memory for tpu_custom_call.1']
    %13 = vsyncpa [#allocation3], 0
    // Predicated region
    $region2: #{tpu_custom_call.1} parent=1 // pred_check
      _
    $region3: #{tpu_custom_call.1} parent=1 // pred_check_branch
      %15 = sbr.rel (0) target = $region5
    $region4: #{tpu_custom_call.1} parent=1 // pred_region
      _
    $region5: #{tpu_custom_call.1} parent=1 // pred_fallthru
      _
    // Predicated region
    $region6: #{tpu_custom_call.1} parent=1 // pred_check
      _
    $region7: #{tpu_custom_call.1} parent=1 // pred_check_branch
      %17 = sbr.rel (0) target = $region9
    $region8: #{tpu_custom_call.1} parent=1 // pred_region
      _
    $region9: #{tpu_custom_call.1} parent=1 // pred_fallthru
      _
    // Predicated region
    $region10: #{tpu_custom_call.1} parent=1 // pred_check
      _
    $region11: #{tpu_custom_call.1} parent=1 // pred_check_branch
      %19 = sbr.rel (0) target = $region13
    $region12: #{tpu_custom_call.1} parent=1 // pred_region
      _
    $region13: #{tpu_custom_call.1} parent=1 // pred_fallthru
      _
    // Predicated region
    $region14: #{tpu_custom_call.1} parent=1 // pred_check
      _
    $region15: #{tpu_custom_call.1} parent=1 // pred_check_branch
      %21 = sbr.rel (0) target = $region17
    $region16: #{tpu_custom_call.1} parent=1 // pred_region
      _
    $region17: #{tpu_custom_call.1} parent=1 // pred_fallthru
      _
    // Predicated region
    $region18: #{tpu_custom_call.1} parent=1 // pred_check
      _
    $region19: #{tpu_custom_call.1} parent=1 // pred_check_branch
      %23 = sbr.rel (0) target = $region21
    $region20: #{tpu_custom_call.1} parent=1 // pred_region
      _
    $region21: #{tpu_custom_call.1} parent=1 // pred_fallthru
      _
    // Predicated region
    $region22: #{tpu_custom_call.1} parent=1 // pred_check
      _
    $region23: #{tpu_custom_call.1} parent=1 // pred_check_branch
      %25 = sbr.rel (0) target = $region25
    $region24: #{tpu_custom_call.1} parent=1 // pred_region
      _
    $region25: #{tpu_custom_call.1} parent=1 // pred_fallthru
      _
    // Predicated region
    $region26: #{tpu_custom_call.1} parent=1 // pred_check
      _
    $region27: #{tpu_custom_call.1} parent=1 // pred_check_branch
      %27 = sbr.rel (0) target = $region29
    $region28: #{tpu_custom_call.1} parent=1 // pred_region
      _
    $region29: #{tpu_custom_call.1} parent=1 // pred_fallthru
      _
    // Predicated region
    $region30: #{tpu_custom_call.1} parent=1 // pred_check
      _
    $region31: #{tpu_custom_call.1} parent=1 // pred_check_branch
      %29 = sbr.rel (0) target = $region33
    $region32: #{tpu_custom_call.1} parent=1 // pred_region
      _
    $region33: #{tpu_custom_call.1} parent=1 // pred_fallthru
      _
    %v30 = vld [vmem:[%s0] sm:$0xff]
    %v31 = vld [vmem:[%s0 + $0x8] sm:$0xff]
    %v32 = vsub.f32 %v30, 0.5
    %v33 = vsub.f32 %v31, 0.5
    %v34 = vand.u32 2147483647, %v32
    %v35 = vand.u32 2147483647, %v33
    %v36 = vadd.f32 %v34, 1.0
    %v37 = vadd.f32 %v35, 1.0
    %v38 = vrcp.pop %v36
    %v39 = vmul.f32 %v32, %v38
    %v40 = vrcp.pop %v37
    %v41 = vmul.f32 %v33, %v40
    %v42 = vadd.f32 %v39, 1.0
    %v43 = vlog2.pop %v42
    %v44 = vmul.f32 %v43, 0.6931472
    %v45 = vmul.f32 -0.5, %v39
    %v46 = vadd.f32 %v45, 1.0
    %v47 = vmul.f32 %v46, %v39
    %v48 = vand.u32 2147483647, %v39
    %vm49 = vcmp.lt.f32.partialorder %v48, 0.0004427343
    %v50 = vsel %vm49, %v47, %v44
    %v51 = vadd.f32 %v41, 1.0
    %v52 = vlog2.pop %v51
    %v53 = vmul.f32 %v52, 0.6931472
    %v54 = vmul.f32 -0.5, %v41
    %v55 = vadd.f32 %v54, 1.0
    %v56 = vmul.f32 %v55, %v41
    %v57 = vand.u32 2147483647, %v41
    %vm58 = vcmp.lt.f32.partialorder %v57, 0.0004427343
    %v59 = vsel %vm58, %v56, %v53
    %v60 = vld [vmem:[%s1] sm:$0xff]
    %v61 = vld [vmem:[%s1 + $0x8] sm:$0xff]
    %v62 = vld [vmem:[%s1 + $0x10] sm:$0xff]
    %v63 = vld [vmem:[%s1 + $0x18] sm:$0xff]
    %v64 = vld [vmem:[%s1 + $0x20] sm:$0xff]
    %v65 = vld [vmem:[%s1 + $0x28] sm:$0xff]
    %v66 = vld [vmem:[%s1 + $0x30] sm:$0xff]
    %v67 = vld [vmem:[%s1 + $0x38] sm:$0xff]
    %v68 = vld [vmem:[%s1 + $0x40] sm:$0xff]
    %v69 = vld [vmem:[%s1 + $0x48] sm:$0xff]
    %v70 = vld [vmem:[%s1 + $0x50] sm:$0xff]
    %v71 = vld [vmem:[%s1 + $0x58] sm:$0xff]
    %v72 = vld [vmem:[%s1 + $0x60] sm:$0xff]
    %v73 = vld [vmem:[%s1 + $0x68] sm:$0xff]
    %v74 = vld [vmem:[%s1 + $0x70] sm:$0xff]
    %v75 = vld [vmem:[%s1 + $0x78] sm:$0xff]
    %v76 = vld [vmem:[%s2] sm:$0x1]
    %v78 = vlaneseq
    %v79 = vshrl.u32 %v78, 7
    %v80 = vsub.s32 0, %v79
    %v81 = vrot.slane %v76, %v80
    %83 = vmatprep.subr.mxu0 0.0
    %84 = vmatpush1.msra.mxu0 %v60
    %85 = vmatprep.subr.mxu0 0.0
    %86 = vmatpush1.msra.mxu0 %v61
    %87 = vmatprep.subr.mxu0 0.0
    %88 = vmatpush1.msra.mxu0 %v62
    %89 = vmatprep.subr.mxu0 0.0
    %90 = vmatpush1.msra.mxu0 %v63
    %91 = vmatprep.subr.mxu0 0.0
    %92 = vmatpush1.msra.mxu0 %v64
    %93 = vmatprep.subr.mxu0 0.0
    %94 = vmatpush1.msra.mxu0 %v65
    %95 = vmatprep.subr.mxu0 0.0
    %96 = vmatpush1.msra.mxu0 %v66
    %97 = vmatprep.subr.mxu0 0.0
    %98 = vmatpush1.msra.mxu0 %v67
    %99 = vmatprep.subr.mxu0 0.0
    %100 = vmatpush1.msra.mxu0 %v68
    %101 = vmatprep.subr.mxu0 0.0
    %102 = vmatpush1.msra.mxu0 %v69
    %103 = vmatprep.subr.mxu0 0.0
    %104 = vmatpush1.msra.mxu0 %v70
    %105 = vmatprep.subr.mxu0 0.0
    %106 = vmatpush1.msra.mxu0 %v71
    %107 = vmatprep.subr.mxu0 0.0
    %108 = vmatpush1.msra.mxu0 %v72
    %109 = vmatprep.subr.mxu0 0.0
    %110 = vmatpush1.msra.mxu0 %v73
    %111 = vmatprep.subr.mxu0 0.0
    %112 = vmatpush1.msra.mxu0 %v74
    %113 = vmatprep.subr.mxu0 0.0
    %114 = vmatpush1.msra.mxu0 %v75
    %115 = vmatprep.subr.mxu0 0.0
    %116 = vmatpush1.msra.mxu0 0.0
    %117 = vmatprep.subr.mxu0 0.0
    %118 = vmatpush1.msra.mxu0 0.0
    %119 = vmatprep.subr.mxu0 0.0
    %120 = vmatpush1.msra.mxu0 0.0
    %121 = vmatprep.subr.mxu0 0.0
    %122 = vmatpush1.msra.mxu0 0.0
    %123 = vmatprep.subr.mxu0 0.0
    %124 = vmatpush1.msra.mxu0 0.0
    %125 = vmatprep.subr.mxu0 0.0
    %126 = vmatpush1.msra.mxu0 0.0
    %127 = vmatprep.subr.mxu0 0.0
    %128 = vmatpush1.msra.mxu0 0.0
    %129 = vmatprep.subr.mxu0 0.0
    %130 = vmatpush1.msra.mxu0 0.0
    %131 = vmatprep.subr.mxu0 0.0
    %132 = vmatpush1.msra.mxu0 0.0
    %133 = vmatprep.subr.mxu0 0.0
    %134 = vmatpush1.msra.mxu0 0.0
    %135 = vmatprep.subr.mxu0 0.0
    %136 = vmatpush1.msra.mxu0 0.0
    %137 = vmatprep.subr.mxu0 0.0
    %138 = vmatpush1.msra.mxu0 0.0
    %139 = vmatprep.subr.mxu0 0.0
    %140 = vmatpush1.msra.mxu0 0.0
    %141 = vmatprep.subr.mxu0 0.0
    %142 = vmatpush1.msra.mxu0 0.0
    %143 = vmatprep.subr.mxu0 0.0
    %144 = vmatpush1.msra.mxu0 0.0
    %145 = vmatprep.subr.mxu0 0.0
    %146 = vmatpush1.msra.mxu0 0.0
    %147 = vmatprep.mubr.f32.mxu0 0.0
    %148 = vmatmul.mubr.f32.gmra.mrb[0].mxu0 %v39
    %v149 = vpop.f32.mrb[0].mxu0
    %v150 = vadd.f32 %v81, %v149
    %v151 = vpop.f32.mrb[0].mxu0
    %152 = vmatprep.mubr.f32.mxu0 0.0
    %153 = vmatmul.mubr.f32.gmra.mrb[0].mxu0 %v41
    %v154 = vpop.f32.mrb[0].mxu0
    %v155 = vadd.f32 %v81, %v154
    %v156 = vpop.f32.mrb[0].mxu0
    %157 = vdwg.mxu0
    %v158 = vld [vmem:[%s3] sm:$0xff]
    %v159 = vld [vmem:[%s3 + $0x8] sm:$0xff]
    %v160 = vld [vmem:[%s3 + $0x10] sm:$0xff]
    %v161 = vld [vmem:[%s3 + $0x18] sm:$0xff]
    %v162 = vld [vmem:[%s3 + $0x20] sm:$0xff]
    %v163 = vld [vmem:[%s3 + $0x28] sm:$0xff]
    %v164 = vld [vmem:[%s3 + $0x30] sm:$0xff]
    %v165 = vld [vmem:[%s3 + $0x38] sm:$0xff]
    %v166 = vld [vmem:[%s3 + $0x40] sm:$0xff]
    %v167 = vld [vmem:[%s3 + $0x48] sm:$0xff]
    %v168 = vld [vmem:[%s3 + $0x50] sm:$0xff]
    %v169 = vld [vmem:[%s3 + $0x58] sm:$0xff]
    %v170 = vld [vmem:[%s3 + $0x60] sm:$0xff]
    %v171 = vld [vmem:[%s3 + $0x68] sm:$0xff]
    %v172 = vld [vmem:[%s3 + $0x70] sm:$0xff]
    %v173 = vld [vmem:[%s3 + $0x78] sm:$0xff]
    %v174 = vld [vmem:[%s4] sm:$0x1]
    %v176 = vlaneseq
    %v177 = vshrl.u32 %v176, 7
    %v178 = vsub.s32 0, %v177
    %v179 = vrot.slane %v174, %v178
    %181 = vmatprep.subr.mxu0 0.0
    %182 = vmatpush1.msra.mxu0 %v158
    %183 = vmatprep.subr.mxu0 0.0
    %184 = vmatpush1.msra.mxu0 %v159
    %185 = vmatprep.subr.mxu0 0.0
    %186 = vmatpush1.msra.mxu0 %v160
    %187 = vmatprep.subr.mxu0 0.0
    %188 = vmatpush1.msra.mxu0 %v161
    %189 = vmatprep.subr.mxu0 0.0
    %190 = vmatpush1.msra.mxu0 %v162
    %191 = vmatprep.subr.mxu0 0.0
    %192 = vmatpush1.msra.mxu0 %v163
    %193 = vmatprep.subr.mxu0 0.0
    %194 = vmatpush1.msra.mxu0 %v164
    %195 = vmatprep.subr.mxu0 0.0
    %196 = vmatpush1.msra.mxu0 %v165
    %197 = vmatprep.subr.mxu0 0.0
    %198 = vmatpush1.msra.mxu0 %v166
    %199 = vmatprep.subr.mxu0 0.0
    %200 = vmatpush1.msra.mxu0 %v167
    %201 = vmatprep.subr.mxu0 0.0
    %202 = vmatpush1.msra.mxu0 %v168
    %203 = vmatprep.subr.mxu0 0.0
    %204 = vmatpush1.msra.mxu0 %v169
    %205 = vmatprep.subr.mxu0 0.0
    %206 = vmatpush1.msra.mxu0 %v170
    %207 = vmatprep.subr.mxu0 0.0
    %208 = vmatpush1.msra.mxu0 %v171
    %209 = vmatprep.subr.mxu0 0.0
    %210 = vmatpush1.msra.mxu0 %v172
    %211 = vmatprep.subr.mxu0 0.0
    %212 = vmatpush1.msra.mxu0 %v173
    %213 = vmatprep.subr.mxu0 0.0
    %214 = vmatpush1.msra.mxu0 0.0
    %215 = vmatprep.subr.mxu0 0.0
    %216 = vmatpush1.msra.mxu0 0.0
    %217 = vmatprep.subr.mxu0 0.0
    %218 = vmatpush1.msra.mxu0 0.0
    %219 = vmatprep.subr.mxu0 0.0
    %220 = vmatpush1.msra.mxu0 0.0
    %221 = vmatprep.subr.mxu0 0.0
    %222 = vmatpush1.msra.mxu0 0.0
    %223 = vmatprep.subr.mxu0 0.0
    %224 = vmatpush1.msra.mxu0 0.0
    %225 = vmatprep.subr.mxu0 0.0
    %226 = vmatpush1.msra.mxu0 0.0
    %227 = vmatprep.subr.mxu0 0.0
    %228 = vmatpush1.msra.mxu0 0.0
    %229 = vmatprep.subr.mxu0 0.0
    %230 = vmatpush1.msra.mxu0 0.0
    %231 = vmatprep.subr.mxu0 0.0
    %232 = vmatpush1.msra.mxu0 0.0
    %233 = vmatprep.subr.mxu0 0.0
    %234 = vmatpush1.msra.mxu0 0.0
    %235 = vmatprep.subr.mxu0 0.0
    %236 = vmatpush1.msra.mxu0 0.0
    %237 = vmatprep.subr.mxu0 0.0
    %238 = vmatpush1.msra.mxu0 0.0
    %239 = vmatprep.subr.mxu0 0.0
    %240 = vmatpush1.msra.mxu0 0.0
    %241 = vmatprep.subr.mxu0 0.0
    %242 = vmatpush1.msra.mxu0 0.0
    %243 = vmatprep.subr.mxu0 0.0
    %244 = vmatpush1.msra.mxu0 0.0
    %245 = vmatprep.mubr.f32.mxu0 0.0
    %246 = vmatmul.mubr.f32.gmra.mrb[0].mxu0 %v50
    %v247 = vpop.f32.mrb[0].mxu0
    %v248 = vadd.f32 %v179, %v247
    %v249 = vpop.f32.mrb[0].mxu0
    %250 = vmatprep.mubr.f32.mxu0 0.0
    %251 = vmatmul.mubr.f32.gmra.mrb[0].mxu0 %v59
    %v252 = vpop.f32.mrb[0].mxu0
    %v253 = vadd.f32 %v179, %v252
    %v254 = vpop.f32.mrb[0].mxu0
    %255 = vdwg.mxu0
    %v256 = vmul.f32 %v248, 1.442695
    %v257 = vpow.pop %v256
    %v258 = vmul.f32 %v253, 1.442695
    %v259 = vpow.pop %v258
    %v260 = vld [vmem:[%s5] sm:$0xff]
    %v261 = vld [vmem:[%s5 + $0x8] sm:$0xff]
    %v262 = vld [vmem:[%s5 + $0x10] sm:$0xff]
    %v263 = vld [vmem:[%s5 + $0x18] sm:$0xff]
    %v264 = vld [vmem:[%s5 + $0x20] sm:$0xff]
    %v265 = vld [vmem:[%s5 + $0x28] sm:$0xff]
    %v266 = vld [vmem:[%s5 + $0x30] sm:$0xff]
    %v267 = vld [vmem:[%s5 + $0x38] sm:$0xff]
    %v268 = vld [vmem:[%s6] sm:$0xff]
    %v269 = vld [vmem:[%s6 + $0x8] sm:$0xff]
    %v270 = vld [vmem:[%s6 + $0x10] sm:$0xff]
    %v271 = vld [vmem:[%s6 + $0x18] sm:$0xff]
    %v272 = vld [vmem:[%s6 + $0x20] sm:$0xff]
    %v273 = vld [vmem:[%s6 + $0x28] sm:$0xff]
    %v274 = vld [vmem:[%s6 + $0x30] sm:$0xff]
    %v275 = vld [vmem:[%s6 + $0x38] sm:$0xff]
    %vm276 = vcmask 523264
    %v278 = vsel %vm276, %v257, 0
    %v281 = vsel %vm276, %v259, 0
    %283 = vmatprep.subr.mxu0 0.0
    %284 = vmatpush1.msra.mxu0 %v268
    %285 = vmatprep.subr.mxu0 0.0
    %286 = vmatpush1.msra.mxu0 %v269
    %287 = vmatprep.subr.mxu0 0.0
    %288 = vmatpush1.msra.mxu0 %v270
    %289 = vmatprep.subr.mxu0 0.0
    %290 = vmatpush1.msra.mxu0 %v271
    %291 = vmatprep.subr.mxu0 0.0
    %292 = vmatpush1.msra.mxu0 %v272
    %293 = vmatprep.subr.mxu0 0.0
    %294 = vmatpush1.msra.mxu0 %v273
    %295 = vmatprep.subr.mxu0 0.0
    %296 = vmatpush1.msra.mxu0 %v274
    %297 = vmatprep.subr.mxu0 0.0
    %298 = vmatpush1.msra.mxu0 %v275
    %299 = vmatprep.subr.mxu0 0.0
    %300 = vmatpush1.msra.mxu0 0.0
    %301 = vmatprep.subr.mxu0 0.0
    %302 = vmatpush1.msra.mxu0 0.0
    %303 = vmatprep.subr.mxu0 0.0
    %304 = vmatpush1.msra.mxu0 0.0
    %305 = vmatprep.subr.mxu0 0.0
    %306 = vmatpush1.msra.mxu0 0.0
    %307 = vmatprep.subr.mxu0 0.0
    %308 = vmatpush1.msra.mxu0 0.0
    %309 = vmatprep.subr.mxu0 0.0
    %310 = vmatpush1.msra.mxu0 0.0
    %311 = vmatprep.subr.mxu0 0.0
    %312 = vmatpush1.msra.mxu0 0.0
    %313 = vmatprep.subr.mxu0 0.0
    %314 = vmatpush1.msra.mxu0 0.0
    %315 = vmatprep.subr.mxu0 0.0
    %316 = vmatpush1.msra.mxu0 0.0
    %317 = vmatprep.subr.mxu0 0.0
    %318 = vmatpush1.msra.mxu0 0.0
    %319 = vmatprep.subr.mxu0 0.0
    %320 = vmatpush1.msra.mxu0 0.0
    %321 = vmatprep.subr.mxu0 0.0
    %322 = vmatpush1.msra.mxu0 0.0
    %323 = vmatprep.subr.mxu0 0.0
    %324 = vmatpush1.msra.mxu0 0.0
    %325 = vmatprep.subr.mxu0 0.0
    %326 = vmatpush1.msra.mxu0 0.0
    %327 = vmatprep.subr.mxu0 0.0
    %328 = vmatpush1.msra.mxu0 0.0
    %329 = vmatprep.subr.mxu0 0.0
    %330 = vmatpush1.msra.mxu0 0.0
    %331 = vmatprep.subr.mxu0 0.0
    %332 = vmatpush1.msra.mxu0 0.0
    %333 = vmatprep.subr.mxu0 0.0
    %334 = vmatpush1.msra.mxu0 0.0
    %335 = vmatprep.subr.mxu0 0.0
    %336 = vmatpush1.msra.mxu0 0.0
    %337 = vmatprep.subr.mxu0 0.0
    %338 = vmatpush1.msra.mxu0 0.0
    %339 = vmatprep.subr.mxu0 0.0
    %340 = vmatpush1.msra.mxu0 0.0
    %341 = vmatprep.subr.mxu0 0.0
    %342 = vmatpush1.msra.mxu0 0.0
    %343 = vmatprep.subr.mxu0 0.0
    %344 = vmatpush1.msra.mxu0 0.0
    %345 = vmatprep.subr.mxu0 0.0
    %346 = vmatpush1.msra.mxu0 0.0
    %347 = vmatprep.mubr.f32.mxu0 0.0
    %348 = vmatmul.mubr.f32.gmra.mrb[0].mxu0 %v278
    %v349 = vpop.f32.mrb[0].mxu0
    %v350 = vadd.f32 0.0, %v349
    %v351 = vpop.f32.mrb[0].mxu0
    %352 = vmatprep.mubr.f32.mxu0 0.0
    %353 = vmatmul.mubr.f32.gmra.mrb[0].mxu0 %v281
    %v354 = vpop.f32.mrb[0].mxu0
    %v355 = vadd.f32 0.0, %v354
    %v356 = vpop.f32.mrb[0].mxu0
    %357 = vdwg.mxu0
    %v359 = vsel %vm276, %v150, 0
    %v362 = vsel %vm276, %v155, 0
    %364 = vmatprep.subr.mxu0 0.0
    %365 = vmatpush1.msra.mxu0 %v260
    %366 = vmatprep.subr.mxu0 0.0
    %367 = vmatpush1.msra.mxu0 %v261
    %368 = vmatprep.subr.mxu0 0.0
    %369 = vmatpush1.msra.mxu0 %v262
    %370 = vmatprep.subr.mxu0 0.0
    %371 = vmatpush1.msra.mxu0 %v263
    %372 = vmatprep.subr.mxu0 0.0
    %373 = vmatpush1.msra.mxu0 %v264
    %374 = vmatprep.subr.mxu0 0.0
    %375 = vmatpush1.msra.mxu0 %v265
    %376 = vmatprep.subr.mxu0 0.0
    %377 = vmatpush1.msra.mxu0 %v266
    %378 = vmatprep.subr.mxu0 0.0
    %379 = vmatpush1.msra.mxu0 %v267
    %380 = vmatprep.subr.mxu0 0.0
    %381 = vmatpush1.msra.mxu0 0.0
    %382 = vmatprep.subr.mxu0 0.0
    %383 = vmatpush1.msra.mxu0 0.0
    %384 = vmatprep.subr.mxu0 0.0
    %385 = vmatpush1.msra.mxu0 0.0
    %386 = vmatprep.subr.mxu0 0.0
    %387 = vmatpush1.msra.mxu0 0.0
    %388 = vmatprep.subr.mxu0 0.0
    %389 = vmatpush1.msra.mxu0 0.0
    %390 = vmatprep.subr.mxu0 0.0
    %391 = vmatpush1.msra.mxu0 0.0
    %392 = vmatprep.subr.mxu0 0.0
    %393 = vmatpush1.msra.mxu0 0.0
    %394 = vmatprep.subr.mxu0 0.0
    %395 = vmatpush1.msra.mxu0 0.0
    %396 = vmatprep.subr.mxu0 0.0
    %397 = vmatpush1.msra.mxu0 0.0
    %398 = vmatprep.subr.mxu0 0.0
    %399 = vmatpush1.msra.mxu0 0.0
    %400 = vmatprep.subr.mxu0 0.0
    %401 = vmatpush1.msra.mxu0 0.0
    %402 = vmatprep.subr.mxu0 0.0
    %403 = vmatpush1.msra.mxu0 0.0
    %404 = vmatprep.subr.mxu0 0.0
    %405 = vmatpush1.msra.mxu0 0.0
    %406 = vmatprep.subr.mxu0 0.0
    %407 = vmatpush1.msra.mxu0 0.0
    %408 = vmatprep.subr.mxu0 0.0
    %409 = vmatpush1.msra.mxu0 0.0
    %410 = vmatprep.subr.mxu0 0.0
    %411 = vmatpush1.msra.mxu0 0.0
    %412 = vmatprep.subr.mxu0 0.0
    %413 = vmatpush1.msra.mxu0 0.0
    %414 = vmatprep.subr.mxu0 0.0
    %415 = vmatpush1.msra.mxu0 0.0
    %416 = vmatprep.subr.mxu0 0.0
    %417 = vmatpush1.msra.mxu0 0.0
    %418 = vmatprep.subr.mxu0 0.0
    %419 = vmatpush1.msra.mxu0 0.0
    %420 = vmatprep.subr.mxu0 0.0
    %421 = vmatpush1.msra.mxu0 0.0
    %422 = vmatprep.subr.mxu0 0.0
    %423 = vmatpush1.msra.mxu0 0.0
    %424 = vmatprep.subr.mxu0 0.0
    %425 = vmatpush1.msra.mxu0 0.0
    %426 = vmatprep.subr.mxu0 0.0
    %427 = vmatpush1.msra.mxu0 0.0
    %428 = vmatprep.mubr.f32.mxu0 0.0
    %429 = vmatmul.mubr.f32.gmra.mrb[0].mxu0 %v359
    %v430 = vpop.f32.mrb[0].mxu0
    %v431 = vadd.f32 %v350, %v430
    %v432 = vpop.f32.mrb[0].mxu0
    %433 = vmatprep.mubr.f32.mxu0 0.0
    %434 = vmatmul.mubr.f32.gmra.mrb[0].mxu0 %v362
    %v435 = vpop.f32.mrb[0].mxu0
    %v436 = vadd.f32 %v355, %v435
    %v437 = vpop.f32.mrb[0].mxu0
    %438 = vdwg.mxu0
    %v439 = vld [vmem:[%s7] sm:$0x1]
    %v440 = vmax.f32 %v439, 0.0
    %v441 = vsub.f32 %v431, %v30
    %v442 = vsub.f32 %v436, %v31
    %v444 = vlaneseq
    %v445 = vshrl.u32 %v444, 7
    %v446 = vsub.s32 0, %v445
    %v447 = vrot.slane %v440, %v446
    %v449 = vmul.f32 %v447, %v441
    %v450 = vmul.f32 %v447, %v442
    %451 = vst [vmem:[#allocation2] sm:$0xff] %v449
    %452 = vst [vmem:[#allocation2 + $0x8] sm:$0xff] %v450
    // Predicated region
    $region34: #{tpu_custom_call.1} parent=1 // pred_check
      _
    $region35: #{tpu_custom_call.1} parent=1 // pred_check_branch
      %454 = sbr.rel (0) target = $region37
    $region36: #{tpu_custom_call.1} parent=1 // pred_region
      %s456 = ssub.s32 256, 256
      %457 = vsyncadd [#allocation3], %s456
      %s458 = sshll.u32 [#allocation2], 4
      %s459 = int_to_ptr.vmem [resolvable:$true] %s458
      %464 = dma.vmem_to_hbm [thread:$0]  %s459, 256, %s8, [#allocation3], 128, 128, 8
    $region37: #{tpu_custom_call.1} parent=1 // pred_fallthru
      _
    // Predicated region
    $region38: #{tpu_custom_call.1} parent=1 // pred_check
      _
    $region39: #{tpu_custom_call.1} parent=1 // pred_check_branch
      %466 = sbr.rel (0) target = $region41
    $region40: #{tpu_custom_call.1} parent=1 // pred_region
      %467 = dma.done [#allocation3], 256
    $region41: #{tpu_custom_call.1} parent=1 // pred_fallthru
      _
    %468 = vsyncpa [#allocation3], 1

</llo_original>
